<compile_context>
chip_gen: v7x
topology: tpu7x:2x2x1
jax: 0.10.0
libtpu: 0.0.40
codegen_flags: <defaults>
</compile_context>

<pallas_src>
from functools import partial

import jax
import jax.numpy as jnp
from jax.experimental import pallas as pl
from jax.experimental.pallas import tpu as pltpu


def _round_up(x: int, m: int) -> int:
    return ((x + m - 1) // m) * m


def _default_vmem_limit() -> int:
    """~75% of physical VMEM, capped at 96 MiB (v5e/v6e 128 MiB -> 96 MiB,
    v7x 64 MiB -> 48 MiB). Falls back to a conservative 48 MiB."""
    try:
        cap = int(pltpu.get_tpu_info().vmem_capacity_bytes)
        return min(96 * 1024 * 1024, (cap * 3) // 4)
    except Exception:
        return 48 * 1024 * 1024


def _est_vmem_bytes(tb, H, Np, w_itemsize, act_itemsize, out_itemsize):
    """Rough VMEM footprint for one grid step (weights single-buffered)."""
    weights = 2 * H * Np * w_itemsize          # (2H, Np), Buffered(1), resident
    bias = 8 * Np * 4                          # (1, Np) f32, sublane-padded
    acts = 2 * 2 * tb * H * act_itemsize       # two inputs, double-buffered
    outs = 2 * tb * Np * out_itemsize          # two outputs (Hp+Lp total), 2 bufs
    scratch = tb * Np * 4 + tb * 2 * H * 4     # f32 acc + combined temp (upper bound)
    return weights + bias + acts + outs + scratch


def _head_kernel(x_ref, h_ref, w_ref, b_ref, hid_ref, out_ref):
    """One batch tile of the fused hierarchy head.

    x_ref, h_ref : (tb, H)        activation tiles
    w_ref        : (2H, Hp+Lp)    stacked [W_i2h | W_i2o], lane-padded per half
    b_ref        : (1, Hp+Lp)     fused f32 bias (zeros in pad lanes)
    hid_ref      : (tb, Hp)       hidden_out tile (lane-dense store)
    out_ref      : (tb, Lp)       logits tile (lane-dense store)
    """
    f32 = jnp.float32
    # TODO(synk): dropout omitted (eval-mode identity); training-mode mask not implemented.
    if x_ref.dtype == jnp.bfloat16 and w_ref.dtype == jnp.bfloat16:
        # v6e/v7x fast path: bf16 tanh + bf16 MXU operands, f32 accumulation.
        tx = jnp.tanh(x_ref[...])
        th = jnp.tanh(h_ref[...])
    else:
        # f32 elementwise path (exact for f32 params; required on v5e EUP).
        tx = jnp.tanh(x_ref[...].astype(f32)).astype(w_ref.dtype)
        th = jnp.tanh(h_ref[...].astype(f32)).astype(w_ref.dtype)

    combined = jnp.concatenate([tx, th], axis=1)              # (tb, 2H)
    acc = jnp.dot(combined, w_ref[...], preferred_element_type=f32)
    acc = acc + b_ref[...]                                    # f32 bias add

    hp = hid_ref.shape[1]                                     # 128-aligned split
    hid_ref[...] = acc[:, :hp].astype(hid_ref.dtype)
    out_ref[...] = acc[:, hp:].astype(out_ref.dtype)


def prepare_hierarchy_head_params(w_i2h, b_i2h, w_i2o, b_i2o, *, mxu_dtype=None):
    """One-time (parameter-load time) weight fusion / padding / cast.

    Weights are in nn.Linear layout: w_i2h (H, 2H), w_i2o (L, 2H).
    Returns (w_fused, b_fused):
      w_fused : (2H, Hp + Lp) in mxu_dtype (pass jnp.bfloat16 for the bf16 MXU
                fast path with f32 accumulation)
      b_fused : (1, Hp + Lp)  float32
    """
    H, two_h = w_i2h.shape
    L = w_i2o.shape[0]
    assert two_h == 2 * H and w_i2o.shape[1] == two_h
    assert b_i2h.shape == (H,) and b_i2o.shape == (L,)
    if mxu_dtype is None:
        mxu_dtype = w_i2h.dtype

    Hp = _round_up(H, 128)
    Lp = _round_up(L, 128)

    wh = w_i2h.T                                  # (2H, H)  -> y = x @ W
    wo = w_i2o.T                                  # (2H, L)
    if Hp != H:
        wh = jnp.pad(wh, ((0, 0), (0, Hp - H)))
    if Lp != L:
        wo = jnp.pad(wo, ((0, 0), (0, Lp - L)))
    w_fused = jnp.concatenate([wh, wo], axis=1).astype(mxu_dtype)   # (2H, Hp+Lp)

    bh = b_i2h.astype(jnp.float32)
    bo = b_i2o.astype(jnp.float32)
    if Hp != H:
        bh = jnp.pad(bh, (0, Hp - H))
    if Lp != L:
        bo = jnp.pad(bo, (0, Lp - L))
    b_fused = jnp.concatenate([bh, bo]).reshape(1, Hp + Lp)
    return w_fused, b_fused


@partial(jax.jit, static_argnames=("num_labels", "block_b", "vmem_limit_bytes"))
def roberta_hierarchy_head_forward(inp, hidden, w_fused, b_fused, *,
                                   num_labels, block_b=512,
                                   vmem_limit_bytes=None):
    """inp, hidden: (B, H). Returns (output (B, num_labels), hidden_out (B, H))."""
    B, H = inp.shape
    assert hidden.shape == (B, H)
    Hp = _round_up(H, 128)
    Np = w_fused.shape[1]
    Lp = Np - Hp
    L = num_labels
    assert w_fused.shape[0] == 2 * H and Lp >= L and Lp % 128 == 0
    out_dtype = inp.dtype

    if vmem_limit_bytes is None:
        vmem_limit_bytes = _default_vmem_limit()

    # ---- batch tiling -------------------------------------------------------
    sub = 16 if out_dtype == jnp.bfloat16 else 8           # min sublane pack
    tb = max(sub, min(_round_up(block_b, sub), _round_up(B, sub)))
    Bp = _round_up(B, sub)
    # v7x megacore: aim for >= 2 "parallel" grid points when the batch allows.
    if Bp // tb < 2 and Bp >= 2 * sub:
        tb = _round_up((Bp + 1) // 2, sub)
    # Shrink the tile until the estimate fits the VMEM budget (v7x: 64 MiB).
    wb = jnp.dtype(w_fused.dtype).itemsize
    ab = jnp.dtype(inp.dtype).itemsize
    ob = jnp.dtype(out_dtype).itemsize
    budget = int(0.8 * vmem_limit_bytes)
    while tb > sub and _est_vmem_bytes(tb, H, Np, wb, ab, ob) > budget:
        new_tb = max(sub, _round_up(tb // 2, sub))
        if new_tb == tb:
            break
        tb = new_tb
    Bp = _round_up(B, tb)

    inp_p = inp if Bp == B else jnp.pad(inp, ((0, Bp - B), (0, 0)))
    hid_p = hidden if Bp == B else jnp.pad(hidden, ((0, Bp - B), (0, 0)))

    grid = (Bp // tb,)
    act_spec = pl.BlockSpec((tb, H), lambda i: (i, 0))
    # Constant index_map -> VMEM-resident; single-buffered (no point double-buffering).
    w_spec = pl.BlockSpec((2 * H, Np), lambda i: (0, 0), pipeline_mode=pl.Buffered(1))
    b_spec = pl.BlockSpec((1, Np), lambda i: (0, 0), pipeline_mode=pl.Buffered(1))
    out_specs = [pl.BlockSpec((tb, Hp), lambda i: (i, 0)),   # hidden_out (lane-dense)
                 pl.BlockSpec((tb, Lp), lambda i: (i, 0))]   # logits (lane-dense)

    hid_full, out_full = pl.pallas_call(
        _head_kernel,
        out_shape=(jax.ShapeDtypeStruct((Bp, Hp), out_dtype),
                   jax.ShapeDtypeStruct((Bp, Lp), out_dtype)),
        grid=grid,
        in_specs=[act_spec, act_spec, w_spec, b_spec],
        out_specs=out_specs,
        compiler_params=pltpu.CompilerParams(
            dimension_semantics=("parallel",),
            vmem_limit_bytes=vmem_limit_bytes,
        ),
    )(inp_p, hid_p, w_fused, b_fused)

    hidden_out = hid_full if (Bp == B and Hp == H) else hid_full[:B, :H]
    output = out_full if (Bp == B and Lp == L) else out_full[:B, :L]
    return output, hidden_out


if __name__ == "__main__":
    # Small, module-consistent shapes: batch=8, hidden_size=32, num_labels=16.
    B, H, L = 8, 32, 16
    key = jax.random.PRNGKey(0)
    k1, k2, k3, k4, k5, k6 = jax.random.split(key, 6)

    # Deterministic param init (PyTorch nn.Linear layout: (out_features, in_features)).
    bound = 1.0 / float(jnp.sqrt(2.0 * H))
    w_i2h = jax.random.uniform(k1, (H, 2 * H), jnp.float32, -bound, bound)
    b_i2h = jax.random.uniform(k2, (H,), jnp.float32, -bound, bound)
    w_i2o = jax.random.uniform(k3, (L, 2 * H), jnp.float32, -bound, bound)
    b_i2o = jax.random.uniform(k4, (L,), jnp.float32, -bound, bound)

    x = jax.random.normal(k5, (B, H), jnp.float32)
    h = jax.random.normal(k6, (B, H), jnp.float32)

    # Reference in plain JAX.
    c = jnp.tanh(jnp.concatenate([x, h], axis=1))
    ref_out = c @ w_i2o.T + b_i2o
    ref_hid = c @ w_i2h.T + b_i2h

    # ---- f32 path (exact) ---------------------------------------------------
    w_f, b_f = prepare_hierarchy_head_params(w_i2h, b_i2h, w_i2o, b_i2o)
    output, hidden_out = roberta_hierarchy_head_forward(x, h, w_f, b_f, num_labels=L)
    jax.block_until_ready((output, hidden_out))
    assert output.shape == (B, L) and hidden_out.shape == (B, H)
    assert jnp.allclose(output, ref_out, atol=1e-5), "output mismatch"
    assert jnp.allclose(hidden_out, ref_hid, atol=1e-5), "hidden mismatch"

    # ---- ragged batch / multi-tile grid path (B=20 -> pad to 24, grid=(3,)) --
    B2 = 20
    x2 = jax.random.normal(jax.random.PRNGKey(1), (B2, H), jnp.float32)
    h2 = jax.random.normal(jax.random.PRNGKey(2), (B2, H), jnp.float32)
    out2, hid2 = roberta_hierarchy_head_forward(x2, h2, w_f, b_f, num_labels=L,
                                                block_b=8)
    jax.block_until_ready((out2, hid2))
    c2 = jnp.tanh(jnp.concatenate([x2, h2], axis=1))
    assert jnp.allclose(out2, c2 @ w_i2o.T + b_i2o, atol=1e-5), "output mismatch (padded batch)"
    assert jnp.allclose(hid2, c2 @ w_i2h.T + b_i2h, atol=1e-5), "hidden mismatch (padded batch)"

    # ---- bf16 MXU fast path (bf16 operands, f32 accumulation) ---------------
    w_fb, b_fb = prepare_hierarchy_head_params(w_i2h, b_i2h, w_i2o, b_i2o,
                                               mxu_dtype=jnp.bfloat16)
    xb, hb = x.astype(jnp.bfloat16), h.astype(jnp.bfloat16)
    outb, hidb = roberta_hierarchy_head_forward(xb, hb, w_fb, b_fb, num_labels=L)
    jax.block_until_ready((outb, hidb))
    assert jnp.allclose(outb.astype(jnp.float32), ref_out, atol=3e-2), "bf16 output mismatch"
    assert jnp.allclose(hidb.astype(jnp.float32), ref_hid, atol=3e-2), "bf16 hidden mismatch"

    print("KERNEL_OK")
</pallas_src>

<mosaic_0001>
module attributes {stable_mosaic.version = 11 : i64} {
  func.func @_head_kernel(%arg0: i32, %arg1: memref<8x32xf32, #tpu.memory_space<vmem>>, %arg2: memref<8x32xf32, #tpu.memory_space<vmem>>, %arg3: memref<64x256xf32, #tpu.memory_space<vmem>>, %arg4: memref<1x256xf32, #tpu.memory_space<vmem>>, %arg5: memref<8x128xf32, #tpu.memory_space<vmem>>, %arg6: memref<8x128xf32, #tpu.memory_space<vmem>>) attributes {dimension_semantics = [#tpu.dimension_semantics<parallel>], iteration_bounds = array<i64: 1>, scalar_prefetch = 0 : i64, scratch_operands = 0 : i64, tpu.core_type = #tpu.core_type<tc>, window_params = [{transform_indices = @transform_0, window_bounds = array<i64: 8, 32>}, {transform_indices = @transform_1, window_bounds = array<i64: 8, 32>}, {pipeline_mode = #tpu.pipeline_mode<synchronous>, transform_indices = @transform_2, window_bounds = array<i64: 64, 256>}, {pipeline_mode = #tpu.pipeline_mode<synchronous>, transform_indices = @transform_3, window_bounds = array<i64: 1, 256>}, {transform_indices = @transform_4, window_bounds = array<i64: 8, 128>}, {transform_indices = @transform_5, window_bounds = array<i64: 8, 128>}]} {
    %c0 = arith.constant 0 : index
    %c0_0 = arith.constant 0 : index
    %0 = vector.load %arg1[%c0, %c0_0] : memref<8x32xf32, #tpu.memory_space<vmem>>, vector<8x32xf32>
    %1 = math.tanh %0 : vector<8x32xf32>
    %c0_1 = arith.constant 0 : index
    %c0_2 = arith.constant 0 : index
    %2 = vector.load %arg2[%c0_1, %c0_2] : memref<8x32xf32, #tpu.memory_space<vmem>>, vector<8x32xf32>
    %3 = math.tanh %2 : vector<8x32xf32>
    %4 = tpu.concatenate %1, %3 in 1 : vector<8x32xf32>, vector<8x32xf32> -> vector<8x64xf32>
    %c0_3 = arith.constant 0 : index
    %c0_4 = arith.constant 0 : index
    %5 = vector.load %arg3[%c0_3, %c0_4] : memref<64x256xf32, #tpu.memory_space<vmem>>, vector<64x256xf32>
    %cst = arith.constant dense<0.000000e+00> : vector<8x256xf32>
    %6 = tpu.matmul %4, %5, %cst {dimension_numbers = #tpu.dot_dimension_numbers<[1], [0], [0], [1], [0, 0, 1, 1], [], []>} : vector<8x64xf32>, vector<64x256xf32>, vector<8x256xf32> -> vector<8x256xf32>
    %c0_5 = arith.constant 0 : index
    %c0_6 = arith.constant 0 : index
    %7 = vector.load %arg4[%c0_5, %c0_6] : memref<1x256xf32, #tpu.memory_space<vmem>>, vector<1x256xf32>
    %8 = vector.broadcast %7 : vector<1x256xf32> to vector<8x256xf32>
    %9 = arith.addf %6, %8 : vector<8x256xf32>
    %10 = vector.extract_strided_slice %9 {offsets = [0, 0], sizes = [8, 128], strides = [1, 1]} : vector<8x256xf32> to vector<8x128xf32>
    %c0_7 = arith.constant 0 : index
    %c0_8 = arith.constant 0 : index
    %11 = vector.load %arg5[%c0_7, %c0_8] : memref<8x128xf32, #tpu.memory_space<vmem>>, vector<8x128xf32>
    tpu.vector_store %arg5[%c0_7, %c0_8], %10 {strides = array<i32>} : memref<8x128xf32, #tpu.memory_space<vmem>>, vector<8x128xf32>,
    %12 = vector.extract_strided_slice %9 {offsets = [0, 128], sizes = [8, 128], strides = [1, 1]} : vector<8x256xf32> to vector<8x128xf32>
    %c0_9 = arith.constant 0 : index
    %c0_10 = arith.constant 0 : index
    %13 = vector.load %arg6[%c0_9, %c0_10] : memref<8x128xf32, #tpu.memory_space<vmem>>, vector<8x128xf32>
    tpu.vector_store %arg6[%c0_9, %c0_10], %12 {strides = array<i32>} : memref<8x128xf32, #tpu.memory_space<vmem>>, vector<8x128xf32>,
    return
  }
  func.func @transform_0(%arg0: i32) -> (i32, i32) {
    %c0_i32 = arith.constant 0 : i32
    %c0_i32_0 = arith.constant 0 : i32
    return %arg0, %c0_i32 : i32, i32
  }
  func.func @transform_1(%arg0: i32) -> (i32, i32) {
    %c0_i32 = arith.constant 0 : i32
    %c0_i32_0 = arith.constant 0 : i32
    return %arg0, %c0_i32 : i32, i32
  }
  func.func @transform_2(%arg0: i32) -> (i32, i32) {
    %c0_i32 = arith.constant 0 : i32
    %c0_i32_0 = arith.constant 0 : i32
    %c0_i32_1 = arith.constant 0 : i32
    return %c0_i32, %c0_i32_0 : i32, i32
  }
  func.func @transform_3(%arg0: i32) -> (i32, i32) {
    %c0_i32 = arith.constant 0 : i32
    %c0_i32_0 = arith.constant 0 : i32
    %c0_i32_1 = arith.constant 0 : i32
    return %c0_i32, %c0_i32_0 : i32, i32
  }
  func.func @transform_4(%arg0: i32) -> (i32, i32) {
    %c0_i32 = arith.constant 0 : i32
    %c0_i32_0 = arith.constant 0 : i32
    return %arg0, %c0_i32 : i32, i32
  }
  func.func @transform_5(%arg0: i32) -> (i32, i32) {
    %c0_i32 = arith.constant 0 : i32
    %c0_i32_0 = arith.constant 0 : i32
    return %arg0, %c0_i32 : i32, i32
  }
}

</mosaic_0001>

<llo_original>
// kernel: roberta_hierarchy_head_forward.1
$region0: #{roberta_hierarchy_head_forward.1}
  #allocation0 [shape = 'u32[]', space=smem, size = 0x4, offset = 0x4, fixed_abs, tag = 'smem constant byte address 0x4 - core index']
  #allocation1 [shape = 'u32[144,128]{1,0:T(1,128)}', space=vmem, size = 0x12000, scoped, tag = 'internal scratch']
  %s0 = inlined_call_operand.hbm [shape: f32[8,32], index: 0, kind: input, shape index: {}]
  %s1 = inlined_call_operand.hbm [shape: f32[8,32], index: 1, kind: input, shape index: {}]
  %s2 = inlined_call_operand.hbm [shape: f32[64,256], index: 2, kind: input, shape index: {}]
  %s3 = inlined_call_operand.vmem [shape: f32[1,256], index: 3, kind: input, shape index: {}]
  %s4 = inlined_call_operand.hbm [shape: f32[8,128], index: 4, kind: output, shape index: {0}]
  %s5 = inlined_call_operand.hbm [shape: f32[8,128], index: 5, kind: output, shape index: {1}]
  %6 = xla_tuple %s4, %s5
  %s7 = sld [smem:[#allocation0]]
  $region46: #{roberta_hierarchy_head_forward.1} parent=0
    _
  %s9 = ssub.s32 1, %s7
  %s10 = scalar_select 0, %s9, %s7
  $region1: #{roberta_hierarchy_head_forward.1} parent=0
    #allocation2 [shape = 'u8[4096]{0}', space=vmem, size = 0x1000, scoped, tag = 'input window, operand 0, single buffered']
    #allocation3 [shape = 's32[1]{0}', space=sflag, size = 0x4, scoped, tag = 'scoped memory for roberta_hierarchy_head_forward.1']
    #allocation4 [shape = 's32[1]{0}', space=sflag, size = 0x4, scoped, tag = 'scoped memory for roberta_hierarchy_head_forward.1']
    #allocation5 [shape = 'u8[4096]{0}', space=vmem, size = 0x1000, scoped, tag = 'input window, operand 1, single buffered']
    #allocation6 [shape = 's32[1]{0}', space=sflag, size = 0x4, scoped, tag = 'scoped memory for roberta_hierarchy_head_forward.1']
    #allocation7 [shape = 'u8[65536]{0}', space=vmem, size = 0x10000, scoped, tag = 'input window, operand 2, single buffered']
    #allocation8 [shape = 'u8[4096]{0}', space=vmem, size = 0x1000, scoped, tag = 'output window, operand 0, single buffered']
    #allocation9 [shape = 'u8[4096]{0}', space=vmem, size = 0x1000, scoped, tag = 'output window, operand 1, single buffered']
    #allocation10 [shape = 's32[1]{0}', space=sflag, size = 0x4, scoped, tag = 'scoped memory for roberta_hierarchy_head_forward.1']
    %11 = vsyncpa [#allocation3], 0
    %12 = vsyncpa [#allocation6], 0
    %13 = vsyncpa [#allocation4], 0
    %14 = vsyncpa [#allocation10], 0
    // Predicated region
    $region2: #{roberta_hierarchy_head_forward.1} parent=1 // pred_check
      _
    $region3: #{roberta_hierarchy_head_forward.1} parent=1 // pred_check_branch
      %16 = sbr.rel (0) target = $region5
    $region4: #{roberta_hierarchy_head_forward.1} parent=1 // pred_region
      %s18 = ssub.s32 128, 128
      %19 = vsyncadd [#allocation3], %s18
      %s21 = sshll.u32 [#allocation2], 4
      %s22 = int_to_ptr.vmem [resolvable:$true] %s21
      %24 = dma.hbm_to_vmem [thread:$0]  %s0, 128, %s22, [#allocation3]
    $region5: #{roberta_hierarchy_head_forward.1} parent=1 // pred_fallthru
      _
    // Predicated region
    $region6: #{roberta_hierarchy_head_forward.1} parent=1 // pred_check
      _
    $region7: #{roberta_hierarchy_head_forward.1} parent=1 // pred_check_branch
      %26 = sbr.rel (0) target = $region9
    $region8: #{roberta_hierarchy_head_forward.1} parent=1 // pred_region
      %s28 = ssub.s32 128, 128
      %29 = vsyncadd [#allocation6], %s28
      %s31 = sshll.u32 [#allocation5], 4
      %s32 = int_to_ptr.vmem [resolvable:$true] %s31
      %34 = dma.hbm_to_vmem [thread:$0]  %s1, 128, %s32, [#allocation6]
    $region9: #{roberta_hierarchy_head_forward.1} parent=1 // pred_fallthru
      _
    // Predicated region
    $region10: #{roberta_hierarchy_head_forward.1} parent=1 // pred_check
      _
    $region11: #{roberta_hierarchy_head_forward.1} parent=1 // pred_check_branch
      %36 = sbr.rel (0) target = $region13
    $region12: #{roberta_hierarchy_head_forward.1} parent=1 // pred_region
      %s38 = ssub.s32 2048, 2048
      %39 = vsyncadd [#allocation6], %s38
      %s40 = sshll.u32 [#allocation7], 4
      %s41 = int_to_ptr.vmem [resolvable:$true] %s40
      %46 = dma.hbm_to_vmem [thread:$0]  %s2, 2048, %s41, [#allocation6], 256, 256, 16
    $region13: #{roberta_hierarchy_head_forward.1} parent=1 // pred_fallthru
      _
    // Predicated region
    $region14: #{roberta_hierarchy_head_forward.1} parent=1 // pred_check
      _
    $region15: #{roberta_hierarchy_head_forward.1} parent=1 // pred_check_branch
      %48 = sbr.rel (0) target = $region17
    $region16: #{roberta_hierarchy_head_forward.1} parent=1 // pred_region
      _
    $region17: #{roberta_hierarchy_head_forward.1} parent=1 // pred_fallthru
      _
    // Predicated region
    $region18: #{roberta_hierarchy_head_forward.1} parent=1 // pred_check
      _
    $region19: #{roberta_hierarchy_head_forward.1} parent=1 // pred_check_branch
      %50 = sbr.rel (0) target = $region21
    $region20: #{roberta_hierarchy_head_forward.1} parent=1 // pred_region
      %51 = dma.done [#allocation3], 128
    $region21: #{roberta_hierarchy_head_forward.1} parent=1 // pred_fallthru
      _
    // Predicated region
    $region22: #{roberta_hierarchy_head_forward.1} parent=1 // pred_check
      _
    $region23: #{roberta_hierarchy_head_forward.1} parent=1 // pred_check_branch
      %53 = sbr.rel (0) target = $region25
    $region24: #{roberta_hierarchy_head_forward.1} parent=1 // pred_region
      %54 = dma.done [#allocation6], 128
    $region25: #{roberta_hierarchy_head_forward.1} parent=1 // pred_fallthru
      _
    // Predicated region
    $region26: #{roberta_hierarchy_head_forward.1} parent=1 // pred_check
      _
    $region27: #{roberta_hierarchy_head_forward.1} parent=1 // pred_check_branch
      %56 = sbr.rel (0) target = $region29
    $region28: #{roberta_hierarchy_head_forward.1} parent=1 // pred_region
      %57 = dma.done [#allocation6], 2048
    $region29: #{roberta_hierarchy_head_forward.1} parent=1 // pred_fallthru
      _
    %v58 = vld [vmem:[#allocation2] sm:$0xff]
    %v59 = vtanh.pop %v58
    %v60 = vld [vmem:[#allocation5] sm:$0xff]
    %v61 = vtanh.pop %v60
    %63 = vrot.lane.b32.xlu0 %v61, 32
    %v64 = vpop.permute.xlu0 %63
    %vm66 = vcmask 261120
    %v67 = vsel %vm66, %v59, %v64
    %v68 = vld [vmem:[#allocation7] sm:$0xff]
    %v69 = vld [vmem:[#allocation7 + $0x8] sm:$0xff]
    %v70 = vld [vmem:[#allocation7 + $0x10] sm:$0xff]
    %v71 = vld [vmem:[#allocation7 + $0x18] sm:$0xff]
    %v72 = vld [vmem:[#allocation7 + $0x20] sm:$0xff]
    %v73 = vld [vmem:[#allocation7 + $0x28] sm:$0xff]
    %v74 = vld [vmem:[#allocation7 + $0x30] sm:$0xff]
    %v75 = vld [vmem:[#allocation7 + $0x38] sm:$0xff]
    %v76 = vld [vmem:[#allocation7 + $0x40] sm:$0xff]
    %v77 = vld [vmem:[#allocation7 + $0x48] sm:$0xff]
    %v78 = vld [vmem:[#allocation7 + $0x50] sm:$0xff]
    %v79 = vld [vmem:[#allocation7 + $0x58] sm:$0xff]
    %v80 = vld [vmem:[#allocation7 + $0x60] sm:$0xff]
    %v81 = vld [vmem:[#allocation7 + $0x68] sm:$0xff]
    %v82 = vld [vmem:[#allocation7 + $0x70] sm:$0xff]
    %v83 = vld [vmem:[#allocation7 + $0x78] sm:$0xff]
    %v84 = vld [vmem:[%s3] sm:$0x3]
    %v86 = vlaneseq
    %v87 = vshrl.u32 %v86, 7
    %v88 = vsub.s32 0, %v87
    %v89 = vrot.slane %v84, %v88
    %v90 = vlaneseq
    %v91 = vshrl.u32 %v90, 7
    %v92 = vsub.s32 1, %v91
    %v93 = vrot.slane %v84, %v92
    %vm96 = vcmask 523264
    %v98 = vsel %vm96, %v67, 0
    %100 = vmatprep.subr.mxu0 %v69
    %101 = vmatpush1.msra.mxu0 %v68
    %102 = vmatprep.subr.mxu0 %v71
    %103 = vmatpush1.msra.mxu0 %v70
    %104 = vmatprep.subr.mxu0 %v73
    %105 = vmatpush1.msra.mxu0 %v72
    %106 = vmatprep.subr.mxu0 %v75
    %107 = vmatpush1.msra.mxu0 %v74
    %108 = vmatprep.subr.mxu0 %v77
    %109 = vmatpush1.msra.mxu0 %v76
    %110 = vmatprep.subr.mxu0 %v79
    %111 = vmatpush1.msra.mxu0 %v78
    %112 = vmatprep.subr.mxu0 %v81
    %113 = vmatpush1.msra.mxu0 %v80
    %114 = vmatprep.subr.mxu0 %v83
    %115 = vmatpush1.msra.mxu0 %v82
    %116 = vmatprep.subr.mxu0 0.0
    %117 = vmatpush1.msra.mxu0 0.0
    %118 = vmatprep.subr.mxu0 0.0
    %119 = vmatpush1.msra.mxu0 0.0
    %120 = vmatprep.subr.mxu0 0.0
    %121 = vmatpush1.msra.mxu0 0.0
    %122 = vmatprep.subr.mxu0 0.0
    %123 = vmatpush1.msra.mxu0 0.0
    %124 = vmatprep.subr.mxu0 0.0
    %125 = vmatpush1.msra.mxu0 0.0
    %126 = vmatprep.subr.mxu0 0.0
    %127 = vmatpush1.msra.mxu0 0.0
    %128 = vmatprep.subr.mxu0 0.0
    %129 = vmatpush1.msra.mxu0 0.0
    %130 = vmatprep.subr.mxu0 0.0
    %131 = vmatpush1.msra.mxu0 0.0
    %132 = vmatprep.subr.mxu0 0.0
    %133 = vmatpush1.msra.mxu0 0.0
    %134 = vmatprep.subr.mxu0 0.0
    %135 = vmatpush1.msra.mxu0 0.0
    %136 = vmatprep.subr.mxu0 0.0
    %137 = vmatpush1.msra.mxu0 0.0
    %138 = vmatprep.subr.mxu0 0.0
    %139 = vmatpush1.msra.mxu0 0.0
    %140 = vmatprep.subr.mxu0 0.0
    %141 = vmatpush1.msra.mxu0 0.0
    %142 = vmatprep.subr.mxu0 0.0
    %143 = vmatpush1.msra.mxu0 0.0
    %144 = vmatprep.subr.mxu0 0.0
    %145 = vmatpush1.msra.mxu0 0.0
    %146 = vmatprep.subr.mxu0 0.0
    %147 = vmatpush1.msra.mxu0 0.0
    %148 = vmatprep.subr.mxu0 0.0
    %149 = vmatpush1.msra.mxu0 0.0
    %150 = vmatprep.subr.mxu0 0.0
    %151 = vmatpush1.msra.mxu0 0.0
    %152 = vmatprep.subr.mxu0 0.0
    %153 = vmatpush1.msra.mxu0 0.0
    %154 = vmatprep.subr.mxu0 0.0
    %155 = vmatpush1.msra.mxu0 0.0
    %156 = vmatprep.subr.mxu0 0.0
    %157 = vmatpush1.msra.mxu0 0.0
    %158 = vmatprep.subr.mxu0 0.0
    %159 = vmatpush1.msra.mxu0 0.0
    %160 = vmatprep.subr.mxu0 0.0
    %161 = vmatpush1.msra.mxu0 0.0
    %162 = vmatprep.subr.mxu0 0.0
    %163 = vmatpush1.msra.mxu0 0.0
    %164 = vmatprep.mubr.f32.mxu0 0.0
    %165 = vmatmul.mubr.f32.gmra.mrb[0].mxu0 %v98
    %v166 = vpop.f32.mrb[0].mxu0
    %v167 = vadd.f32 %v89, %v166
    %v168 = vpop.f32.mrb[0].mxu0
    %v169 = vadd.f32 %v93, %v168
    %170 = vdwg.mxu0
    %171 = vst [vmem:[#allocation8] sm:$0xff] %v167
    %172 = vst [vmem:[#allocation9] sm:$0xff] %v169
    // Predicated region
    $region30: #{roberta_hierarchy_head_forward.1} parent=1 // pred_check
      _
    $region31: #{roberta_hierarchy_head_forward.1} parent=1 // pred_check_branch
      %174 = sbr.rel (0) target = $region33
    $region32: #{roberta_hierarchy_head_forward.1} parent=1 // pred_region
      %s176 = ssub.s32 128, 128
      %177 = vsyncadd [#allocation4], %s176
      %s179 = sshll.u32 [#allocation8], 4
      %s180 = int_to_ptr.vmem [resolvable:$true] %s179
      %182 = dma.vmem_to_hbm [thread:$0]  %s180, 128, %s4, [#allocation4]
    $region33: #{roberta_hierarchy_head_forward.1} parent=1 // pred_fallthru
      _
    // Predicated region
    $region34: #{roberta_hierarchy_head_forward.1} parent=1 // pred_check
      _
    $region35: #{roberta_hierarchy_head_forward.1} parent=1 // pred_check_branch
      %184 = sbr.rel (0) target = $region37
    $region36: #{roberta_hierarchy_head_forward.1} parent=1 // pred_region
      %s186 = ssub.s32 128, 128
      %187 = vsyncadd [#allocation10], %s186
      %s189 = sshll.u32 [#allocation9], 4
      %s190 = int_to_ptr.vmem [resolvable:$true] %s189
      %192 = dma.vmem_to_hbm [thread:$0]  %s190, 128, %s5, [#allocation10]
    $region37: #{roberta_hierarchy_head_forward.1} parent=1 // pred_fallthru
      _
    // Predicated region
    $region38: #{roberta_hierarchy_head_forward.1} parent=1 // pred_check
      _
    $region39: #{roberta_hierarchy_head_forward.1} parent=1 // pred_check_branch
      %194 = sbr.rel (0) target = $region41
    $region40: #{roberta_hierarchy_head_forward.1} parent=1 // pred_region
      %195 = dma.done [#allocation4], 128
    $region41: #{roberta_hierarchy_head_forward.1} parent=1 // pred_fallthru
      _
    // Predicated region
    $region42: #{roberta_hierarchy_head_forward.1} parent=1 // pred_check
      _
    $region43: #{roberta_hierarchy_head_forward.1} parent=1 // pred_check_branch
      %197 = sbr.rel (0) target = $region45
    $region44: #{roberta_hierarchy_head_forward.1} parent=1 // pred_region
      %198 = dma.done [#allocation10], 128
    $region45: #{roberta_hierarchy_head_forward.1} parent=1 // pred_fallthru
      _
    %199 = vsyncpa [#allocation3], 1
    %200 = vsyncpa [#allocation6], 1
    %201 = vsyncpa [#allocation4], 1
    %202 = vsyncpa [#allocation10], 1

</llo_original>
